<compile_context>
chip_gen: v7x
topology: tpu7x:2x2x1
jax: 0.10.0
libtpu: 0.0.40
codegen_flags: <defaults>
</compile_context>

<pallas_src>
import jax
import jax.numpy as jnp
from jax.experimental import pallas as pl
from jax.experimental.pallas import tpu as pltpu

EPS = 1e-5
LANE = 128


def _round_up(n, m):
    return ((n + m - 1) // m) * m


def _pick_batch_tile(B, max_tile=512, split_threshold=256):
    """Small batch -> one full-array tile; big batch -> >=2 tiles of <=max_tile rows."""
    if B <= split_threshold:
        return B                       # block dim == full array dim (always legal)
    return min(max_tile, _round_up((B + 1) // 2, 8))   # multiple of 8 sublanes


def _mlp_kernel(x_ref,
                w1_ref, b1_ref,
                w2_ref, b2_ref,
                w3_ref, b3_ref,
                o_ref):
    # Hidden layer 1: Linear (+ folded bias/BN) -> ReLU  (Dropout = identity in eval)
    x = x_ref[...].astype(jnp.bfloat16)                                  # (TB, 41)
    h = jnp.dot(x, w1_ref[...], preferred_element_type=jnp.float32)      # (TB, 128)
    h = jnp.maximum(h + b1_ref[...], 0.0)
    # Hidden layer 2
    h = jnp.dot(h.astype(jnp.bfloat16), w2_ref[...],
                preferred_element_type=jnp.float32)                      # (TB, 128)
    h = jnp.maximum(h + b2_ref[...], 0.0)
    # Readout layer: plain affine, no activation; directly narrow output
    h = jnp.dot(h.astype(jnp.bfloat16), w3_ref[...],
                preferred_element_type=jnp.float32)                      # (TB, out_dim)
    o_ref[...] = (h + b3_ref[...]).astype(o_ref.dtype)


def top_common_mlp_forward(x, padded_params, out_dim, *, max_batch_tile=512):
    """x: (B, n_in) f32 (unpadded); padded_params: 3 x (W bf16, bias f32) with
    W1:(n_in,128), W2:(128,128), W3:(128,out_dim)."""
    assert len(padded_params) == 3, "kernel is specialized to top_layers=2 (3 Linears)"
    B, n_in = x.shape
    (w1, b1), (w2, b2), (w3, b3) = padded_params
    assert w1.shape[0] == n_in and w3.shape[1] == out_dim

    tile = _pick_batch_tile(B, max_batch_tile)
    grid = (pl.cdiv(B, tile),)

    in_specs = [
        pl.BlockSpec((tile, n_in), lambda i: (i, 0)),   # x tile: pipelined over batch
        pl.BlockSpec(w1.shape, lambda i: (0, 0)),       # weights/biases stay VMEM-resident
        pl.BlockSpec(b1.shape, lambda i: (0, 0)),
        pl.BlockSpec(w2.shape, lambda i: (0, 0)),
        pl.BlockSpec(b2.shape, lambda i: (0, 0)),
        pl.BlockSpec(w3.shape, lambda i: (0, 0)),
        pl.BlockSpec(b3.shape, lambda i: (0, 0)),
    ]
    out = pl.pallas_call(
        _mlp_kernel,
        grid=grid,
        in_specs=in_specs,
        out_specs=pl.BlockSpec((tile, out_dim), lambda i: (i, 0)),
        out_shape=jax.ShapeDtypeStruct((B, out_dim), jnp.float32),
        compiler_params=pltpu.CompilerParams(
            dimension_semantics=("parallel",)),
    )(x, w1, b1, w2, b2, w3, b3)
    return out


def make_params(key, dims, batch_norm=True):
    """Deterministic synthetic Linear (+ eval-mode BatchNorm1d on hidden layers),
    folded per layer to (W_eff, bias_eff, has_relu)."""
    folded = []
    n_layers = len(dims) - 1
    for i in range(n_layers):
        fan_in, fan_out = dims[i], dims[i + 1]
        key, kw, kb, kg, kbe, km, kv = jax.random.split(key, 7)
        bound = 1.0 / jnp.sqrt(jnp.float32(fan_in))
        W = jax.random.uniform(kw, (fan_in, fan_out), jnp.float32, -bound, bound)
        b = jax.random.uniform(kb, (fan_out,), jnp.float32, -bound, bound)
        is_hidden = i < n_layers - 1
        if is_hidden and batch_norm:
            gamma = jax.random.uniform(kg, (fan_out,), jnp.float32, 0.5, 1.5)
            beta = jax.random.uniform(kbe, (fan_out,), jnp.float32, -0.1, 0.1)
            run_mean = jax.random.uniform(km, (fan_out,), jnp.float32, -0.1, 0.1)
            run_var = jax.random.uniform(kv, (fan_out,), jnp.float32, 0.5, 1.5)
            # BN(xW + b) = ((xW + b) - mean) * gamma / sqrt(var+eps) + beta
            scale = gamma / jnp.sqrt(run_var + EPS)
            W_eff = W * scale[None, :]                 # fold scale into weight cols
            b_eff = (b - run_mean) * scale + beta
        else:
            W_eff, b_eff = W, b
        folded.append((W_eff, b_eff, is_hidden))
    return folded


def pad_params(folded):
    """Pad folded params for the kernel: hidden feature dims -> 128-lane multiples,
    first layer keeps the true input dim (x is fed unpadded), last layer keeps the
    true output dim (narrow writeback). Weights -> bf16, biases -> f32.
    Pad region is exactly zero so padded lanes stay 0 through ReLU."""
    n = len(folded)
    padded = []
    for idx, (W, b, _) in enumerate(folded):
        fi, fo = W.shape
        fi_pad = fi if idx == 0 else _round_up(fi, LANE)
        fo_pad = fo if idx == n - 1 else _round_up(fo, LANE)
        Wp = jnp.zeros((fi_pad, fo_pad), jnp.float32)
        Wp = Wp.at[:fi, :fo].set(W).astype(jnp.bfloat16)
        bp = jnp.zeros((1, fo_pad), jnp.float32).at[0, :fo].set(b)
        padded.append((Wp, bp))
    return padded


def _reference_forward(x, folded):
    """Pure-JAX reference using the same bf16 MXU inputs / f32 accumulation."""
    h = x
    for (W, b, has_relu) in folded:
        h = jnp.dot(h.astype(jnp.bfloat16), W.astype(jnp.bfloat16),
                    preferred_element_type=jnp.float32) + b[None, :]
        if has_relu:
            h = jnp.maximum(h, 0.0)
    return h


if __name__ == "__main__":
    # HyperParams defaults: bottom_output=40 -> readout input dim 41,
    # top_output=3, top_layers=2 -> dims [41, 20, 10, 3]; batch_size=20.
    batch = 20
    in_dim = 40 + 1
    top_output = 3
    top_layers = 2
    dims = [in_dim] + [in_dim // (2 ** (l + 1)) for l in range(top_layers)] + [top_output]

    key = jax.random.PRNGKey(0)
    key, kx = jax.random.split(key)
    x = jax.random.normal(kx, (batch, in_dim), jnp.float32)

    folded = make_params(key, dims, batch_norm=True)
    padded = pad_params(folded)

    # Small-batch path (single full-array tile, grid=1)
    out = top_common_mlp_forward(x, padded, top_output)
    out = jax.block_until_ready(out)
    ref = _reference_forward(x, folded)
    assert out.shape == (batch, top_output)
    assert jnp.allclose(out, ref, atol=1e-4, rtol=1e-4), float(jnp.max(jnp.abs(out - ref)))

    # Multi-tile path with a partial last block (exercises OOB-masked writeback)
    key, kx2 = jax.random.split(key)
    batch2 = 600
    x2 = jax.random.normal(kx2, (batch2, in_dim), jnp.float32)
    out2 = jax.block_until_ready(top_common_mlp_forward(x2, padded, top_output))
    ref2 = _reference_forward(x2, folded)
    assert out2.shape == (batch2, top_output)
    assert jnp.allclose(out2, ref2, atol=1e-4, rtol=1e-4), float(jnp.max(jnp.abs(out2 - ref2)))

    print("KERNEL_OK")
</pallas_src>

<mosaic_0001>
module attributes {stable_mosaic.version = 11 : i64} {
  func.func @_mlp_kernel(%arg0: i32, %arg1: memref<20x41xf32, #tpu.memory_space<vmem>>, %arg2: memref<41x128xbf16, #tpu.memory_space<vmem>>, %arg3: memref<1x128xf32, #tpu.memory_space<vmem>>, %arg4: memref<128x128xbf16, #tpu.memory_space<vmem>>, %arg5: memref<1x128xf32, #tpu.memory_space<vmem>>, %arg6: memref<128x3xbf16, #tpu.memory_space<vmem>>, %arg7: memref<1x3xf32, #tpu.memory_space<vmem>>, %arg8: memref<20x3xf32, #tpu.memory_space<vmem>>) attributes {dimension_semantics = [#tpu.dimension_semantics<parallel>], iteration_bounds = array<i64: 1>, scalar_prefetch = 0 : i64, scratch_operands = 0 : i64, tpu.core_type = #tpu.core_type<tc>, window_params = [{transform_indices = @transform_0, window_bounds = array<i64: 20, 41>}, {pipeline_mode = #tpu.pipeline_mode<synchronous>, transform_indices = @transform_1, window_bounds = array<i64: 41, 128>}, {pipeline_mode = #tpu.pipeline_mode<synchronous>, transform_indices = @transform_2, window_bounds = array<i64: 1, 128>}, {pipeline_mode = #tpu.pipeline_mode<synchronous>, transform_indices = @transform_3, window_bounds = array<i64: 128, 128>}, {pipeline_mode = #tpu.pipeline_mode<synchronous>, transform_indices = @transform_4, window_bounds = array<i64: 1, 128>}, {pipeline_mode = #tpu.pipeline_mode<synchronous>, transform_indices = @transform_5, window_bounds = array<i64: 128, 3>}, {pipeline_mode = #tpu.pipeline_mode<synchronous>, transform_indices = @transform_6, window_bounds = array<i64: 1, 3>}, {transform_indices = @transform_7, window_bounds = array<i64: 20, 3>}]} {
    %c0 = arith.constant 0 : index
    %c0_0 = arith.constant 0 : index
    %0 = vector.load %arg1[%c0, %c0_0] : memref<20x41xf32, #tpu.memory_space<vmem>>, vector<20x41xf32>
    %1 = arith.truncf %0 : vector<20x41xf32> to vector<20x41xbf16>
    %c0_1 = arith.constant 0 : index
    %c0_2 = arith.constant 0 : index
    %2 = vector.load %arg2[%c0_1, %c0_2] : memref<41x128xbf16, #tpu.memory_space<vmem>>, vector<41x128xbf16>
    %cst = arith.constant dense<0.000000e+00> : vector<20x128xf32>
    %3 = tpu.matmul %1, %2, %cst {dimension_numbers = #tpu.dot_dimension_numbers<[1], [0], [0], [1], [0, 0, 1, 1], [], []>} : vector<20x41xbf16>, vector<41x128xbf16>, vector<20x128xf32> -> vector<20x128xf32>
    %c0_3 = arith.constant 0 : index
    %c0_4 = arith.constant 0 : index
    %4 = vector.load %arg3[%c0_3, %c0_4] : memref<1x128xf32, #tpu.memory_space<vmem>>, vector<1x128xf32>
    %5 = vector.broadcast %4 : vector<1x128xf32> to vector<20x128xf32>
    %6 = arith.addf %3, %5 : vector<20x128xf32>
    %cst_5 = arith.constant 0.000000e+00 : f32
    %7 = vector.broadcast %cst_5 : f32 to vector<20x128xf32>
    %8 = arith.maximumf %6, %7 : vector<20x128xf32>
    %9 = arith.truncf %8 : vector<20x128xf32> to vector<20x128xbf16>
    %c0_6 = arith.constant 0 : index
    %c0_7 = arith.constant 0 : index
    %10 = vector.load %arg4[%c0_6, %c0_7] : memref<128x128xbf16, #tpu.memory_space<vmem>>, vector<128x128xbf16>
    %cst_8 = arith.constant dense<0.000000e+00> : vector<20x128xf32>
    %11 = tpu.matmul %9, %10, %cst_8 {dimension_numbers = #tpu.dot_dimension_numbers<[1], [0], [0], [1], [0, 0, 1, 1], [], []>} : vector<20x128xbf16>, vector<128x128xbf16>, vector<20x128xf32> -> vector<20x128xf32>
    %c0_9 = arith.constant 0 : index
    %c0_10 = arith.constant 0 : index
    %12 = vector.load %arg5[%c0_9, %c0_10] : memref<1x128xf32, #tpu.memory_space<vmem>>, vector<1x128xf32>
    %13 = vector.broadcast %12 : vector<1x128xf32> to vector<20x128xf32>
    %14 = arith.addf %11, %13 : vector<20x128xf32>
    %cst_11 = arith.constant 0.000000e+00 : f32
    %15 = vector.broadcast %cst_11 : f32 to vector<20x128xf32>
    %16 = arith.maximumf %14, %15 : vector<20x128xf32>
    %17 = arith.truncf %16 : vector<20x128xf32> to vector<20x128xbf16>
    %c0_12 = arith.constant 0 : index
    %c0_13 = arith.constant 0 : index
    %18 = vector.load %arg6[%c0_12, %c0_13] : memref<128x3xbf16, #tpu.memory_space<vmem>>, vector<128x3xbf16>
    %cst_14 = arith.constant dense<0.000000e+00> : vector<20x3xf32>
    %19 = tpu.matmul %17, %18, %cst_14 {dimension_numbers = #tpu.dot_dimension_numbers<[1], [0], [0], [1], [0, 0, 1, 1], [], []>} : vector<20x128xbf16>, vector<128x3xbf16>, vector<20x3xf32> -> vector<20x3xf32>
    %c0_15 = arith.constant 0 : index
    %c0_16 = arith.constant 0 : index
    %20 = vector.load %arg7[%c0_15, %c0_16] : memref<1x3xf32, #tpu.memory_space<vmem>>, vector<1x3xf32>
    %21 = vector.broadcast %20 : vector<1x3xf32> to vector<20x3xf32>
    %22 = arith.addf %19, %21 : vector<20x3xf32>
    %c0_17 = arith.constant 0 : index
    %c0_18 = arith.constant 0 : index
    %23 = vector.load %arg8[%c0_17, %c0_18] : memref<20x3xf32, #tpu.memory_space<vmem>>, vector<20x3xf32>
    tpu.vector_store %arg8[%c0_17, %c0_18], %22 {strides = array<i32>} : memref<20x3xf32, #tpu.memory_space<vmem>>, vector<20x3xf32>,
    return
  }
  func.func @transform_0(%arg0: i32) -> (i32, i32) {
    %c0_i32 = arith.constant 0 : i32
    %c0_i32_0 = arith.constant 0 : i32
    return %arg0, %c0_i32 : i32, i32
  }
  func.func @transform_1(%arg0: i32) -> (i32, i32) {
    %c0_i32 = arith.constant 0 : i32
    %c0_i32_0 = arith.constant 0 : i32
    %c0_i32_1 = arith.constant 0 : i32
    return %c0_i32, %c0_i32_0 : i32, i32
  }
  func.func @transform_2(%arg0: i32) -> (i32, i32) {
    %c0_i32 = arith.constant 0 : i32
    %c0_i32_0 = arith.constant 0 : i32
    %c0_i32_1 = arith.constant 0 : i32
    return %c0_i32, %c0_i32_0 : i32, i32
  }
  func.func @transform_3(%arg0: i32) -> (i32, i32) {
    %c0_i32 = arith.constant 0 : i32
    %c0_i32_0 = arith.constant 0 : i32
    %c0_i32_1 = arith.constant 0 : i32
    return %c0_i32, %c0_i32_0 : i32, i32
  }
  func.func @transform_4(%arg0: i32) -> (i32, i32) {
    %c0_i32 = arith.constant 0 : i32
    %c0_i32_0 = arith.constant 0 : i32
    %c0_i32_1 = arith.constant 0 : i32
    return %c0_i32, %c0_i32_0 : i32, i32
  }
  func.func @transform_5(%arg0: i32) -> (i32, i32) {
    %c0_i32 = arith.constant 0 : i32
    %c0_i32_0 = arith.constant 0 : i32
    %c0_i32_1 = arith.constant 0 : i32
    return %c0_i32, %c0_i32_0 : i32, i32
  }
  func.func @transform_6(%arg0: i32) -> (i32, i32) {
    %c0_i32 = arith.constant 0 : i32
    %c0_i32_0 = arith.constant 0 : i32
    %c0_i32_1 = arith.constant 0 : i32
    return %c0_i32, %c0_i32_0 : i32, i32
  }
  func.func @transform_7(%arg0: i32) -> (i32, i32) {
    %c0_i32 = arith.constant 0 : i32
    %c0_i32_0 = arith.constant 0 : i32
    return %arg0, %c0_i32 : i32, i32
  }
}

</mosaic_0001>

<llo_original>
// kernel: tpu_custom_call.1
$region0: #{tpu_custom_call.1}
  #allocation0 [shape = 'u32[]', space=smem, size = 0x4, offset = 0x4, fixed_abs, tag = 'smem constant byte address 0x4 - core index']
  #allocation1 [shape = 'u32[144,128]{1,0:T(1,128)}', space=vmem, size = 0x12000, scoped, tag = 'internal scratch']
  %s0 = inlined_call_operand.hbm [shape: f32[20,41], index: 0, kind: input, shape index: {}]
  %s1 = inlined_call_operand.hbm [shape: bf16[41,128], index: 1, kind: input, shape index: {}]
  %s2 = inlined_call_operand.vmem [shape: f32[1,128], index: 2, kind: input, shape index: {}]
  %s3 = inlined_call_operand.vmem [shape: bf16[128,128], index: 3, kind: input, shape index: {}]
  %s4 = inlined_call_operand.vmem [shape: f32[1,128], index: 4, kind: input, shape index: {}]
  %s5 = inlined_call_operand.vmem [shape: bf16[128,3], index: 5, kind: input, shape index: {}]
  %s6 = inlined_call_operand.vmem [shape: f32[1,3], index: 6, kind: input, shape index: {}]
  %s7 = inlined_call_operand.vmem [shape: f32[20,3], index: 7, kind: output, shape index: {}]
  %s8 = sld [smem:[#allocation0]]
  $region46: #{tpu_custom_call.1} parent=0
    _
  %s10 = ssub.s32 1, %s8
  %s11 = scalar_select 0, %s10, %s8
  $region1: #{tpu_custom_call.1} parent=0
    #allocation2 [shape = 'u8[12288]{0}', space=vmem, size = 0x3000, scoped, tag = 'input window, operand 0, single buffered']
    #allocation3 [shape = 's32[1]{0}', space=sflag, size = 0x4, scoped, tag = 'scoped memory for tpu_custom_call.1']
    #allocation4 [shape = 'u8[12288]{0}', space=vmem, size = 0x3000, scoped, tag = 'input window, operand 1, single buffered']
    #allocation5 [shape = 's32[1]{0}', space=sflag, size = 0x4, scoped, tag = 'scoped memory for tpu_custom_call.1']
    %12 = vsyncpa [#allocation3], 0
    %13 = vsyncpa [#allocation5], 0
    // Predicated region
    $region2: #{tpu_custom_call.1} parent=1 // pred_check
      _
    $region3: #{tpu_custom_call.1} parent=1 // pred_check_branch
      %15 = sbr.rel (0) target = $region5
    $region4: #{tpu_custom_call.1} parent=1 // pred_region
      %s17 = ssub.s32 384, 384
      %18 = vsyncadd [#allocation3], %s17
      %s19 = sshll.u32 [#allocation2], 4
      %s20 = int_to_ptr.vmem [resolvable:$true] %s19
      %25 = dma.hbm_to_vmem [thread:$0]  %s0, 384, %s20, [#allocation3], 128, 128, 8
    $region5: #{tpu_custom_call.1} parent=1 // pred_fallthru
      _
    // Predicated region
    $region6: #{tpu_custom_call.1} parent=1 // pred_check
      _
    $region7: #{tpu_custom_call.1} parent=1 // pred_check_branch
      %27 = sbr.rel (0) target = $region9
    $region8: #{tpu_custom_call.1} parent=1 // pred_region
      %s29 = ssub.s32 384, 384
      %30 = vsyncadd [#allocation5], %s29
      %s31 = sshll.u32 [#allocation4], 4
      %s32 = int_to_ptr.vmem [resolvable:$true] %s31
      %37 = dma.hbm_to_vmem [thread:$0]  %s1, 384, %s32, [#allocation5], 64, 64, 4
    $region9: #{tpu_custom_call.1} parent=1 // pred_fallthru
      _
    // Predicated region
    $region10: #{tpu_custom_call.1} parent=1 // pred_check
      _
    $region11: #{tpu_custom_call.1} parent=1 // pred_check_branch
      %39 = sbr.rel (0) target = $region13
    $region12: #{tpu_custom_call.1} parent=1 // pred_region
      _
    $region13: #{tpu_custom_call.1} parent=1 // pred_fallthru
      _
    // Predicated region
    $region14: #{tpu_custom_call.1} parent=1 // pred_check
      _
    $region15: #{tpu_custom_call.1} parent=1 // pred_check_branch
      %41 = sbr.rel (0) target = $region17
    $region16: #{tpu_custom_call.1} parent=1 // pred_region
      _
    $region17: #{tpu_custom_call.1} parent=1 // pred_fallthru
      _
    // Predicated region
    $region18: #{tpu_custom_call.1} parent=1 // pred_check
      _
    $region19: #{tpu_custom_call.1} parent=1 // pred_check_branch
      %43 = sbr.rel (0) target = $region21
    $region20: #{tpu_custom_call.1} parent=1 // pred_region
      _
    $region21: #{tpu_custom_call.1} parent=1 // pred_fallthru
      _
    // Predicated region
    $region22: #{tpu_custom_call.1} parent=1 // pred_check
      _
    $region23: #{tpu_custom_call.1} parent=1 // pred_check_branch
      %45 = sbr.rel (0) target = $region25
    $region24: #{tpu_custom_call.1} parent=1 // pred_region
      _
    $region25: #{tpu_custom_call.1} parent=1 // pred_fallthru
      _
    // Predicated region
    $region26: #{tpu_custom_call.1} parent=1 // pred_check
      _
    $region27: #{tpu_custom_call.1} parent=1 // pred_check_branch
      %47 = sbr.rel (0) target = $region29
    $region28: #{tpu_custom_call.1} parent=1 // pred_region
      _
    $region29: #{tpu_custom_call.1} parent=1 // pred_fallthru
      _
    // Predicated region
    $region30: #{tpu_custom_call.1} parent=1 // pred_check
      _
    $region31: #{tpu_custom_call.1} parent=1 // pred_check_branch
      %49 = sbr.rel (0) target = $region33
    $region32: #{tpu_custom_call.1} parent=1 // pred_region
      %50 = dma.done [#allocation3], 384
    $region33: #{tpu_custom_call.1} parent=1 // pred_fallthru
      _
    // Predicated region
    $region34: #{tpu_custom_call.1} parent=1 // pred_check
      _
    $region35: #{tpu_custom_call.1} parent=1 // pred_check_branch
      %52 = sbr.rel (0) target = $region37
    $region36: #{tpu_custom_call.1} parent=1 // pred_region
      %53 = dma.done [#allocation5], 384
    $region37: #{tpu_custom_call.1} parent=1 // pred_fallthru
      _
    %v55 = vld [vmem:[#allocation2] sm:$0xff]
    %v56 = vld [vmem:[#allocation2 + $0x8] sm:$0xff]
    %v57 = vld [vmem:[#allocation2 + $0x10] sm:$0xf]
    %v58 = vpack.c.bf16 %v56, %v55
    %v59 = vpack.c.bf16 %v57, %v57
    %v60 = vld [vmem:[#allocation4] sm:$0xf]
    %v61 = vld [vmem:[#allocation4 + $0x4] sm:$0xf]
    %v62 = vld [vmem:[#allocation4 + $0x8] sm:$0xf]
    %v63 = vld [vmem:[#allocation4 + $0xc] sm:$0xf]
    %v64 = vld [vmem:[#allocation4 + $0x10] sm:$0xf]
    %v65 = vld [vmem:[#allocation4 + $0x14] sm:$0x1]
    %v66 = vld [vmem:[%s2] sm:$0x1]
    %v68 = vlaneseq
    %v69 = vshrl.u32 %v68, 7
    %v70 = vsub.s32 0, %v69
    %v71 = vrot.slane %v66, %v70
    %v79 = vunpack.c.l.b16 %v60
    %v80 = vunpack.c.l.b16 %v61
    %v81 = vunpack.c.l.b16 %v62
    %v82 = vunpack.c.l.b16 %v63
    %v83 = vunpack.c.l.b16 %v64
    %v84 = vunpack.c.l.b16 %v65
    %v85 = vpack.c.b16 %v80, %v79
    %v86 = vpack.c.b16 %v82, %v81
    %v87 = vpack.c.b16 %v84, %v83
    %vm90 = vcmask 334848
    %v92 = vsel %vm90, %v58, 0
    %v95 = vsel %vm90, %v59, 0
    %vm97 = vcmask 1043456
    %vm98 = vcmask 1044480
    %v99 = vsel %vm97, 4294967295, 65535
    %v100 = vsel %vm98, %v99, 0
    %v102 = vand.u32 %v87, %v100
    %104 = vmatprep.subr.bf16.mxu0 0
    %105 = vmatpush1.bf16.msra.mxu0 %v85
    %106 = vmatprep.subr.bf16.mxu0 0
    %107 = vmatpush1.bf16.msra.mxu0 %v86
    %108 = vmatprep.subr.bf16.mxu0 0
    %109 = vmatpush1.bf16.msra.mxu0 %v102
    %110 = vmatprep.subr.bf16.mxu0 0
    %111 = vmatpush1.bf16.msra.mxu0 0
    %112 = vmatprep.subr.bf16.mxu0 0
    %113 = vmatpush1.bf16.msra.mxu0 0
    %114 = vmatprep.subr.bf16.mxu0 0
    %115 = vmatpush1.bf16.msra.mxu0 0
    %116 = vmatprep.subr.bf16.mxu0 0
    %117 = vmatpush1.bf16.msra.mxu0 0
    %118 = vmatprep.subr.bf16.mxu0 0
    %119 = vmatpush1.bf16.msra.mxu0 0
    %120 = vmatprep.subr.bf16.mxu0 0
    %121 = vmatpush1.bf16.msra.mxu0 0
    %122 = vmatprep.subr.bf16.mxu0 0
    %123 = vmatpush1.bf16.msra.mxu0 0
    %124 = vmatprep.subr.bf16.mxu0 0
    %125 = vmatpush1.bf16.msra.mxu0 0
    %126 = vmatprep.subr.bf16.mxu0 0
    %127 = vmatpush1.bf16.msra.mxu0 0
    %128 = vmatprep.subr.bf16.mxu0 0
    %129 = vmatpush1.bf16.msra.mxu0 0
    %130 = vmatprep.subr.bf16.mxu0 0
    %131 = vmatpush1.bf16.msra.mxu0 0
    %132 = vmatprep.subr.bf16.mxu0 0
    %133 = vmatpush1.bf16.msra.mxu0 0
    %134 = vmatprep.subr.bf16.mxu0 0
    %135 = vmatpush1.bf16.msra.mxu0 0
    %136 = vmatprep.mubr.bf16.mxu0 0
    %137 = vmatmul.mubr.bf16.gmra.mrb[0].mxu0 %v92
    %v138 = vpop.f32.mrb[0].mxu0
    %v139 = vadd.f32 %v71, %v138
    %v140 = vpop.f32.mrb[0].mxu0
    %v141 = vpop.f32.mrb[0].mxu0
    %v142 = vadd.f32 %v71, %v141
    %v143 = vpop.f32.mrb[0].mxu0
    %144 = vmatprep.mubr.bf16.mxu0 0
    %145 = vmatmul.mubr.bf16.gmra.mrb[0].mxu0 %v95
    %v146 = vpop.f32.mrb[0].mxu0
    %v147 = vadd.f32 %v71, %v146
    %v148 = vpop.f32.mrb[0].mxu0
    %v149 = vpop.f32.mrb[0].mxu0
    %v150 = vpop.f32.mrb[0].mxu0
    %151 = vdwg.mxu0
    %v152 = vmax.f32 %v139, 0.0
    %v153 = vmax.f32 %v142, 0.0
    %v154 = vmax.f32 %v147, 0.0
    %v155 = vpack.c.bf16 %v153, %v152
    %v156 = vpack.c.bf16 %v154, %v154
    %v157 = vld [vmem:[%s3] sm:$0xf]
    %v158 = vld [vmem:[%s3 + $0x4] sm:$0xf]
    %v159 = vld [vmem:[%s3 + $0x8] sm:$0xf]
    %v160 = vld [vmem:[%s3 + $0xc] sm:$0xf]
    %v161 = vld [vmem:[%s3 + $0x10] sm:$0xf]
    %v162 = vld [vmem:[%s3 + $0x14] sm:$0xf]
    %v163 = vld [vmem:[%s3 + $0x18] sm:$0xf]
    %v164 = vld [vmem:[%s3 + $0x1c] sm:$0xf]
    %v165 = vld [vmem:[%s3 + $0x20] sm:$0xf]
    %v166 = vld [vmem:[%s3 + $0x24] sm:$0xf]
    %v167 = vld [vmem:[%s3 + $0x28] sm:$0xf]
    %v168 = vld [vmem:[%s3 + $0x2c] sm:$0xf]
    %v169 = vld [vmem:[%s3 + $0x30] sm:$0xf]
    %v170 = vld [vmem:[%s3 + $0x34] sm:$0xf]
    %v171 = vld [vmem:[%s3 + $0x38] sm:$0xf]
    %v172 = vld [vmem:[%s3 + $0x3c] sm:$0xf]
    %v173 = vld [vmem:[%s4] sm:$0x1]
    %v175 = vlaneseq
    %v176 = vshrl.u32 %v175, 7
    %v177 = vsub.s32 0, %v176
    %v178 = vrot.slane %v173, %v177
    %v196 = vunpack.c.l.b16 %v157
    %v197 = vunpack.c.l.b16 %v158
    %v198 = vunpack.c.l.b16 %v159
    %v199 = vunpack.c.l.b16 %v160
    %v200 = vunpack.c.l.b16 %v161
    %v201 = vunpack.c.l.b16 %v162
    %v202 = vunpack.c.l.b16 %v163
    %v203 = vunpack.c.l.b16 %v164
    %v204 = vunpack.c.l.b16 %v165
    %v205 = vunpack.c.l.b16 %v166
    %v206 = vunpack.c.l.b16 %v167
    %v207 = vunpack.c.l.b16 %v168
    %v208 = vunpack.c.l.b16 %v169
    %v209 = vunpack.c.l.b16 %v170
    %v210 = vunpack.c.l.b16 %v171
    %v211 = vunpack.c.l.b16 %v172
    %v212 = vpack.c.b16 %v197, %v196
    %v213 = vpack.c.b16 %v199, %v198
    %v214 = vpack.c.b16 %v201, %v200
    %v215 = vpack.c.b16 %v203, %v202
    %v216 = vpack.c.b16 %v205, %v204
    %v217 = vpack.c.b16 %v207, %v206
    %v218 = vpack.c.b16 %v209, %v208
    %v219 = vpack.c.b16 %v211, %v210
    %228 = vmatprep.subr.bf16.mxu0 0
    %229 = vmatpush1.bf16.msra.mxu0 %v212
    %230 = vmatprep.subr.bf16.mxu0 0
    %231 = vmatpush1.bf16.msra.mxu0 %v213
    %232 = vmatprep.subr.bf16.mxu0 0
    %233 = vmatpush1.bf16.msra.mxu0 %v214
    %234 = vmatprep.subr.bf16.mxu0 0
    %235 = vmatpush1.bf16.msra.mxu0 %v215
    %236 = vmatprep.subr.bf16.mxu0 0
    %237 = vmatpush1.bf16.msra.mxu0 %v216
    %238 = vmatprep.subr.bf16.mxu0 0
    %239 = vmatpush1.bf16.msra.mxu0 %v217
    %240 = vmatprep.subr.bf16.mxu0 0
    %241 = vmatpush1.bf16.msra.mxu0 %v218
    %242 = vmatprep.subr.bf16.mxu0 0
    %243 = vmatpush1.bf16.msra.mxu0 %v219
    %244 = vmatprep.subr.bf16.mxu0 0
    %245 = vmatpush1.bf16.msra.mxu0 0
    %246 = vmatprep.subr.bf16.mxu0 0
    %247 = vmatpush1.bf16.msra.mxu0 0
    %248 = vmatprep.subr.bf16.mxu0 0
    %249 = vmatpush1.bf16.msra.mxu0 0
    %250 = vmatprep.subr.bf16.mxu0 0
    %251 = vmatpush1.bf16.msra.mxu0 0
    %252 = vmatprep.subr.bf16.mxu0 0
    %253 = vmatpush1.bf16.msra.mxu0 0
    %254 = vmatprep.subr.bf16.mxu0 0
    %255 = vmatpush1.bf16.msra.mxu0 0
    %256 = vmatprep.subr.bf16.mxu0 0
    %257 = vmatpush1.bf16.msra.mxu0 0
    %258 = vmatprep.subr.bf16.mxu0 0
    %259 = vmatpush1.bf16.msra.mxu0 0
    %260 = vmatprep.mubr.bf16.mxu0 0
    %261 = vmatmul.mubr.bf16.gmra.mrb[0].mxu0 %v155
    %v262 = vpop.f32.mrb[0].mxu0
    %v263 = vadd.f32 %v178, %v262
    %v264 = vpop.f32.mrb[0].mxu0
    %v265 = vpop.f32.mrb[0].mxu0
    %v266 = vadd.f32 %v178, %v265
    %v267 = vpop.f32.mrb[0].mxu0
    %268 = vmatprep.mubr.bf16.mxu0 0
    %269 = vmatmul.mubr.bf16.gmra.mrb[0].mxu0 %v156
    %v270 = vpop.f32.mrb[0].mxu0
    %v271 = vadd.f32 %v178, %v270
    %v272 = vpop.f32.mrb[0].mxu0
    %v273 = vpop.f32.mrb[0].mxu0
    %v274 = vpop.f32.mrb[0].mxu0
    %275 = vdwg.mxu0
    %v276 = vmax.f32 %v263, 0.0
    %v277 = vmax.f32 %v266, 0.0
    %v278 = vmax.f32 %v271, 0.0
    %v279 = vpack.c.bf16 %v277, %v276
    %v280 = vpack.c.bf16 %v278, %v278
    %v281 = vld [vmem:[%s5] sm:$0xf]
    %v282 = vld [vmem:[%s5 + $0x4] sm:$0xf]
    %v283 = vld [vmem:[%s5 + $0x8] sm:$0xf]
    %v284 = vld [vmem:[%s5 + $0xc] sm:$0xf]
    %v285 = vld [vmem:[%s5 + $0x10] sm:$0xf]
    %v286 = vld [vmem:[%s5 + $0x14] sm:$0xf]
    %v287 = vld [vmem:[%s5 + $0x18] sm:$0xf]
    %v288 = vld [vmem:[%s5 + $0x1c] sm:$0xf]
    %v289 = vld [vmem:[%s5 + $0x20] sm:$0xf]
    %v290 = vld [vmem:[%s5 + $0x24] sm:$0xf]
    %v291 = vld [vmem:[%s5 + $0x28] sm:$0xf]
    %v292 = vld [vmem:[%s5 + $0x2c] sm:$0xf]
    %v293 = vld [vmem:[%s5 + $0x30] sm:$0xf]
    %v294 = vld [vmem:[%s5 + $0x34] sm:$0xf]
    %v295 = vld [vmem:[%s5 + $0x38] sm:$0xf]
    %v296 = vld [vmem:[%s5 + $0x3c] sm:$0xf]
    %v297 = vld [vmem:[%s6] sm:$0x1]
    %v299 = vlaneseq
    %v300 = vshrl.u32 %v299, 7
    %v301 = vsub.s32 0, %v300
    %v302 = vrot.slane %v297, %v301
    %v320 = vunpack.c.l.b16 %v281
    %v321 = vunpack.c.l.b16 %v282
    %v322 = vunpack.c.l.b16 %v283
    %v323 = vunpack.c.l.b16 %v284
    %v324 = vunpack.c.l.b16 %v285
    %v325 = vunpack.c.l.b16 %v286
    %v326 = vunpack.c.l.b16 %v287
    %v327 = vunpack.c.l.b16 %v288
    %v328 = vunpack.c.l.b16 %v289
    %v329 = vunpack.c.l.b16 %v290
    %v330 = vunpack.c.l.b16 %v291
    %v331 = vunpack.c.l.b16 %v292
    %v332 = vunpack.c.l.b16 %v293
    %v333 = vunpack.c.l.b16 %v294
    %v334 = vunpack.c.l.b16 %v295
    %v335 = vunpack.c.l.b16 %v296
    %v336 = vpack.c.b16 %v321, %v320
    %v337 = vpack.c.b16 %v323, %v322
    %v338 = vpack.c.b16 %v325, %v324
    %v339 = vpack.c.b16 %v327, %v326
    %v340 = vpack.c.b16 %v329, %v328
    %v341 = vpack.c.b16 %v331, %v330
    %v342 = vpack.c.b16 %v333, %v332
    %v343 = vpack.c.b16 %v335, %v334
    %352 = vmatprep.subr.bf16.mxu0 0
    %353 = vmatpush1.bf16.msra.mxu0 %v336
    %354 = vmatprep.subr.bf16.mxu0 0
    %355 = vmatpush1.bf16.msra.mxu0 %v337
    %356 = vmatprep.subr.bf16.mxu0 0
    %357 = vmatpush1.bf16.msra.mxu0 %v338
    %358 = vmatprep.subr.bf16.mxu0 0
    %359 = vmatpush1.bf16.msra.mxu0 %v339
    %360 = vmatprep.subr.bf16.mxu0 0
    %361 = vmatpush1.bf16.msra.mxu0 %v340
    %362 = vmatprep.subr.bf16.mxu0 0
    %363 = vmatpush1.bf16.msra.mxu0 %v341
    %364 = vmatprep.subr.bf16.mxu0 0
    %365 = vmatpush1.bf16.msra.mxu0 %v342
    %366 = vmatprep.subr.bf16.mxu0 0
    %367 = vmatpush1.bf16.msra.mxu0 %v343
    %368 = vmatprep.subr.bf16.mxu0 0
    %369 = vmatpush1.bf16.msra.mxu0 0
    %370 = vmatprep.subr.bf16.mxu0 0
    %371 = vmatpush1.bf16.msra.mxu0 0
    %372 = vmatprep.subr.bf16.mxu0 0
    %373 = vmatpush1.bf16.msra.mxu0 0
    %374 = vmatprep.subr.bf16.mxu0 0
    %375 = vmatpush1.bf16.msra.mxu0 0
    %376 = vmatprep.subr.bf16.mxu0 0
    %377 = vmatpush1.bf16.msra.mxu0 0
    %378 = vmatprep.subr.bf16.mxu0 0
    %379 = vmatpush1.bf16.msra.mxu0 0
    %380 = vmatprep.subr.bf16.mxu0 0
    %381 = vmatpush1.bf16.msra.mxu0 0
    %382 = vmatprep.subr.bf16.mxu0 0
    %383 = vmatpush1.bf16.msra.mxu0 0
    %384 = vmatprep.mubr.bf16.mxu0 0
    %385 = vmatmul.mubr.bf16.gmra.mrb[0].mxu0 %v279
    %v386 = vpop.f32.mrb[0].mxu0
    %v387 = vadd.f32 %v302, %v386
    %v388 = vpop.f32.mrb[0].mxu0
    %v389 = vpop.f32.mrb[0].mxu0
    %v390 = vadd.f32 %v302, %v389
    %v391 = vpop.f32.mrb[0].mxu0
    %392 = vmatprep.mubr.bf16.mxu0 0
    %393 = vmatmul.mubr.bf16.gmra.mrb[0].mxu0 %v280
    %v394 = vpop.f32.mrb[0].mxu0
    %v395 = vadd.f32 %v302, %v394
    %v396 = vpop.f32.mrb[0].mxu0
    %v397 = vpop.f32.mrb[0].mxu0
    %v398 = vpop.f32.mrb[0].mxu0
    %399 = vdwg.mxu0
    %vm400 = vcmask 23552
    %401 = vst.msk [vmem:[%s7] sm:$0xff] %vm400, %v387
    %402 = vst.msk [vmem:[%s7 + $0x8] sm:$0xff] %vm400, %v390
    %vm403 = vcmask 19456
    %404 = vst.msk [vmem:[%s7 + $0x10] sm:$0xf] %vm403, %v395
    // Predicated region
    $region38: #{tpu_custom_call.1} parent=1 // pred_check
      _
    $region39: #{tpu_custom_call.1} parent=1 // pred_check_branch
      %406 = sbr.rel (0) target = $region41
    $region40: #{tpu_custom_call.1} parent=1 // pred_region
      _
    $region41: #{tpu_custom_call.1} parent=1 // pred_fallthru
      _
    // Predicated region
    $region42: #{tpu_custom_call.1} parent=1 // pred_check
      _
    $region43: #{tpu_custom_call.1} parent=1 // pred_check_branch
      %408 = sbr.rel (0) target = $region45
    $region44: #{tpu_custom_call.1} parent=1 // pred_region
      _
    $region45: #{tpu_custom_call.1} parent=1 // pred_fallthru
      _
    %409 = vsyncpa [#allocation3], 1
    %410 = vsyncpa [#allocation5], 1

</llo_original>
